<compile_context>
chip_gen: v5e
topology: v5e:2x2
jax: 0.10.0
libtpu: 0.0.40
codegen_flags: <defaults>
</compile_context>

<pallas_src>
import functools

import jax
import jax.numpy as jnp
from jax.experimental import pallas as pl
from jax.experimental.pallas import tpu as pltpu


_VMEM_LIMIT_BYTES = 48 * 1024 * 1024   # explicit scoped-VMEM request
_VMEM_BUDGET_BYTES = 36 * 1024 * 1024  # design target incl. double buffering


def _round_up(x, m):
    return (x + m - 1) // m * m


def _cdiv(a, b):
    return -(-a // b)


def _sublane(itemsize):
    # Required multiple for the second-to-last block dim, by element width.
    if itemsize == 1:
        return 32
    if itemsize == 2:
        return 16
    return 8


def _matmul_kernel(x_ref, w_ref, o_ref, *, compute_dtype):
    # One output tile per grid step: o = x_tile @ w_tile (f32 accumulation on
    # the MXU).  Operands are optionally cast to the MXU-native dtype in VMEM.
    a = x_ref[...]
    b = w_ref[...]
    if compute_dtype is not None:
        a = a.astype(compute_dtype)
        b = b.astype(compute_dtype)
    o_ref[...] = jnp.dot(a, b, preferred_element_type=jnp.float32).astype(o_ref.dtype)


def matrix_forward(x, weight, compute_dtype=jnp.bfloat16):
    """Equivalent of Matrix.forward: torch.matmul(x, weight).

    x: [..., n], weight: [n, n] -> [..., n] (output keeps x's dtype).

    compute_dtype: dtype fed to the MXU (cast in VMEM, f32 accumulation).
                   Default bfloat16 (native single-pass MXU on v5e/v6e/v7x);
                   pass None to use the operands' own dtype (exact f32 parity).
    """
    n = weight.shape[0]
    assert weight.shape == (n, n)
    assert x.shape[-1] == n

    out_dtype = x.dtype
    lead_shape = x.shape[:-1]
    m = 1
    for d in lead_shape:
        m *= int(d)

    # Genuinely empty input (a leading dim of 0): nothing to compute.
    if m == 0:
        return jnp.zeros(x.shape, dtype=out_dtype)

    x2d = x.reshape(m, n)  # collapse of leading dims: layout-preserving, free

    x_item = x2d.dtype.itemsize
    w_item = weight.dtype.itemsize
    o_item = jnp.dtype(out_dtype).itemsize

    # --- M tile -------------------------------------------------------------
    sub = max(_sublane(x_item), _sublane(o_item))
    if m <= 256:
        tm = _round_up(m, sub)
    else:
        tm = 512
        if _cdiv(m, tm) < 2:
            # Keep >=2 M blocks so the "parallel" M axis can shard across both
            # TensorCores on v7x (no-op on single-TC v5e/v6e).
            tm = _round_up(_cdiv(m, 2), sub)

    # --- N tile: keep W fully resident when it fits the VMEM budget ---------
    def _footprint(tn_):
        xb = tm * n * x_item
        wb = n * tn_ * w_item
        ob = tm * tn_ * o_item
        return 2 * (xb + wb + ob)  # worst case: everything double-buffered

    tn = n
    if _footprint(tn) > _VMEM_BUDGET_BYTES:
        tn = 512
        while tn > 256 and _footprint(tn) > _VMEM_BUDGET_BYTES:
            tn -= 256
        while _footprint(tn) > _VMEM_BUDGET_BYTES and tm > sub:
            tm = max(sub, _round_up(tm // 2, sub))

    num_m_blocks = _cdiv(m, tm)
    num_n_blocks = _cdiv(n, tn)
    grid = (num_m_blocks, num_n_blocks)

    # --- cost estimate (accounts for re-streaming) ---------------------------
    w_refetches = num_m_blocks if num_n_blocks > 1 else 1
    cost = pl.CostEstimate(
        flops=2 * m * n * n,
        transcendentals=0,
        bytes_accessed=int(
            m * n * x_item              # x read once (index constant across j)
            + n * n * w_item * w_refetches
            + m * n * o_item            # output written once
        ),
    )

    kernel = functools.partial(_matmul_kernel, compute_dtype=compute_dtype)

    out2d = pl.pallas_call(
        kernel,
        out_shape=jax.ShapeDtypeStruct((m, n), out_dtype),
        grid=grid,
        in_specs=[
            # x block: last dim == full feature dim -> no padding needed.
            pl.BlockSpec((tm, n), lambda i, j: (i, 0)),
            # W block: first dim == full K dim; last dim tiled only if needed.
            pl.BlockSpec((n, tn), lambda i, j: (0, j)),
        ],
        out_specs=pl.BlockSpec((tm, tn), lambda i, j: (i, j)),
        compiler_params=pltpu.CompilerParams(
            dimension_semantics=("parallel", "parallel"),
            vmem_limit_bytes=_VMEM_LIMIT_BYTES,
        ),
        cost_estimate=cost,
    )(x2d, weight)

    return out2d.reshape(*lead_shape, n)


def init_orthogonal_weight(key, n, dtype=jnp.float32):
    """Deterministic orthogonal init (mirrors torch.nn.init.orthogonal_)."""
    a = jax.random.normal(key, (n, n), dtype=jnp.float32)
    q, r = jnp.linalg.qr(a)
    d = jnp.sign(jnp.diagonal(r))
    q = q * d[None, :]
    return q.astype(dtype)


if __name__ == "__main__":
    n = 32          # hidden size (square matrix dimension)
    batch, seq = 2, 8

    key = jax.random.PRNGKey(0)
    k_w, k_x = jax.random.split(key)

    weight = init_orthogonal_weight(k_w, n)
    x = jax.random.normal(k_x, (batch, seq, n), dtype=jnp.float32)

    ref = jnp.matmul(x, weight)

    # Default path: bf16 MXU operands (cast in VMEM), f32 accumulation.
    out = matrix_forward(x, weight)
    out = jax.block_until_ready(out)
    assert out.shape == (batch, seq, n)
    assert out.dtype == x.dtype
    assert jnp.allclose(out, ref, atol=3e-2, rtol=3e-2)

    # Exact-parity path: f32 operands end to end (matches the PyTorch module).
    out_f32 = jax.block_until_ready(matrix_forward(x, weight, compute_dtype=None))
    assert jnp.allclose(out_f32, ref, atol=1e-5, rtol=1e-5)

    print("KERNEL_OK")
</pallas_src>

<mosaic_0001>
module attributes {stable_mosaic.version = 11 : i64} {
  func.func @_matmul_kernel(%arg0: i32, %arg1: i32, %arg2: memref<16x32xf32, #tpu.memory_space<vmem>>, %arg3: memref<32x32xf32, #tpu.memory_space<vmem>>, %arg4: memref<16x32xf32, #tpu.memory_space<vmem>>) attributes {dimension_semantics = [#tpu.dimension_semantics<parallel>, #tpu.dimension_semantics<parallel>], iteration_bounds = array<i64: 1, 1>, scalar_prefetch = 0 : i64, scratch_operands = 0 : i64, tpu.core_type = #tpu.core_type<tc>, window_params = [{transform_indices = @transform_0, window_bounds = array<i64: 16, 32>}, {transform_indices = @transform_1, window_bounds = array<i64: 32, 32>}, {transform_indices = @transform_2, window_bounds = array<i64: 16, 32>}]} {
    %c0 = arith.constant 0 : index
    %c0_0 = arith.constant 0 : index
    %0 = vector.load %arg2[%c0, %c0_0] : memref<16x32xf32, #tpu.memory_space<vmem>>, vector<16x32xf32>
    %c0_1 = arith.constant 0 : index
    %c0_2 = arith.constant 0 : index
    %1 = vector.load %arg3[%c0_1, %c0_2] : memref<32x32xf32, #tpu.memory_space<vmem>>, vector<32x32xf32>
    %2 = arith.truncf %0 : vector<16x32xf32> to vector<16x32xbf16>
    %3 = arith.truncf %1 : vector<32x32xf32> to vector<32x32xbf16>
    %cst = arith.constant dense<0.000000e+00> : vector<16x32xf32>
    %4 = tpu.matmul %2, %3, %cst {dimension_numbers = #tpu.dot_dimension_numbers<[1], [0], [0], [1], [0, 0, 1, 1], [], []>} : vector<16x32xbf16>, vector<32x32xbf16>, vector<16x32xf32> -> vector<16x32xf32>
    %c0_3 = arith.constant 0 : index
    %c0_4 = arith.constant 0 : index
    %5 = vector.load %arg4[%c0_3, %c0_4] : memref<16x32xf32, #tpu.memory_space<vmem>>, vector<16x32xf32>
    tpu.vector_store %arg4[%c0_3, %c0_4], %4 {strides = array<i32>} : memref<16x32xf32, #tpu.memory_space<vmem>>, vector<16x32xf32>,
    return
  }
  func.func @transform_0(%arg0: i32, %arg1: i32) -> (i32, i32) {
    %c0_i32 = arith.constant 0 : i32
    %c0_i32_0 = arith.constant 0 : i32
    return %arg0, %c0_i32 : i32, i32
  }
  func.func @transform_1(%arg0: i32, %arg1: i32) -> (i32, i32) {
    %c0_i32 = arith.constant 0 : i32
    %c0_i32_0 = arith.constant 0 : i32
    return %c0_i32, %arg1 : i32, i32
  }
  func.func @transform_2(%arg0: i32, %arg1: i32) -> (i32, i32) {
    %c0_i32 = arith.constant 0 : i32
    return %arg0, %arg1 : i32, i32
  }
}

</mosaic_0001>

<llo_original>
// kernel: tpu_custom_call.1
$region0: #{tpu_custom_call.1}
  #allocation0 [shape = 'u32[]', space=smem, size = 0x4, offset = 0x4, fixed_abs, tag = 'smem constant byte address 0x4 - core index']
  #allocation1 [shape = 'u32[72,128]{1,0:T(1,128)}', space=vmem, size = 0x9000, scoped, tag = 'internal scratch']
  %s0 = inlined_call_operand.hbm [shape: f32[16,32], index: 0, kind: input, shape index: {}]
  %s1 = inlined_call_operand.hbm [shape: f32[32,32], index: 1, kind: input, shape index: {}]
  %s2 = inlined_call_operand.hbm [shape: f32[16,32], index: 2, kind: output, shape index: {}]
  %s3 = sld [smem:[#allocation0]]
  $region26: #{tpu_custom_call.1} parent=0
    _
  %s5 = ssub.s32 1, %s3
  %s6 = scalar_select 0, %s5, %s3
  $region1: #{tpu_custom_call.1} parent=0
    #allocation2 [shape = 'u8[8192]{0}', space=vmem, size = 0x2000, scoped, tag = 'input window, operand 0, single buffered']
    #allocation3 [shape = 's32[1]{0}', space=sflag, size = 0x4, scoped, tag = 'scoped memory for tpu_custom_call.1']
    #allocation4 [shape = 's32[1]{0}', space=sflag, size = 0x4, scoped, tag = 'scoped memory for tpu_custom_call.1']
    #allocation5 [shape = 'u8[16384]{0}', space=vmem, size = 0x4000, scoped, tag = 'input window, operand 1, single buffered']
    #allocation6 [shape = 's32[1]{0}', space=sflag, size = 0x4, scoped, tag = 'scoped memory for tpu_custom_call.1']
    #allocation7 [shape = 'u8[8192]{0}', space=vmem, size = 0x2000, scoped, tag = 'output window, operand 0, single buffered']
    %7 = vsyncpa [#allocation3], 0
    %8 = vsyncpa [#allocation6], 0
    %9 = vsyncpa [#allocation4], 0
    // Predicated region
    $region2: #{tpu_custom_call.1} parent=1 // pred_check
      _
    $region3: #{tpu_custom_call.1} parent=1 // pred_check_branch
      %11 = sbr.rel (0) target = $region5
    $region4: #{tpu_custom_call.1} parent=1 // pred_region
      %13 = vsyncadd [#allocation3], 0
      %s14 = sshll.u32 %s0, 4
      %s15 = int_to_ptr.hbm [resolvable:$true] %s14
      %s16 = sshll.u32 [#allocation2], 4
      %s17 = int_to_ptr.vmem [resolvable:$true] %s16
      %22 = dma.hbm_to_vmem [thread:$0]  %s15, 256, %s17, [#allocation3], 128, 128, 8
    $region5: #{tpu_custom_call.1} parent=1 // pred_fallthru
      _
    // Predicated region
    $region6: #{tpu_custom_call.1} parent=1 // pred_check
      _
    $region7: #{tpu_custom_call.1} parent=1 // pred_check_branch
      %24 = sbr.rel (0) target = $region9
    $region8: #{tpu_custom_call.1} parent=1 // pred_region
      %26 = vsyncadd [#allocation6], 0
      %s27 = sshll.u32 %s1, 4
      %s28 = int_to_ptr.hbm [resolvable:$true] %s27
      %s29 = sshll.u32 [#allocation5], 4
      %s30 = int_to_ptr.vmem [resolvable:$true] %s29
      %35 = dma.hbm_to_vmem [thread:$0]  %s28, 512, %s30, [#allocation6], 128, 128, 8
    $region9: #{tpu_custom_call.1} parent=1 // pred_fallthru
      _
    // Predicated region
    $region10: #{tpu_custom_call.1} parent=1 // pred_check
      _
    $region11: #{tpu_custom_call.1} parent=1 // pred_check_branch
      %37 = sbr.rel (0) target = $region13
    $region12: #{tpu_custom_call.1} parent=1 // pred_region
      %39 = dma.done [#allocation3], 256
    $region13: #{tpu_custom_call.1} parent=1 // pred_fallthru
      _
    // Predicated region
    $region14: #{tpu_custom_call.1} parent=1 // pred_check
      _
    $region15: #{tpu_custom_call.1} parent=1 // pred_check_branch
      %41 = sbr.rel (0) target = $region17
    $region16: #{tpu_custom_call.1} parent=1 // pred_region
      %43 = dma.done [#allocation6], 512
    $region17: #{tpu_custom_call.1} parent=1 // pred_fallthru
      _
    %v45 = vld [vmem:[#allocation2] sm:$0xff]
    %v46 = vld [vmem:[#allocation2 + $0x8] sm:$0xff]
    %v47 = vld [vmem:[#allocation5] sm:$0xff]
    %v48 = vld [vmem:[#allocation5 + $0x8] sm:$0xff]
    %v49 = vld [vmem:[#allocation5 + $0x10] sm:$0xff]
    %v50 = vld [vmem:[#allocation5 + $0x18] sm:$0xff]
    %v51 = vpack.c.bf16 %v46, %v45
    %v52 = vpack.c.bf16 %v48, %v47
    %v53 = vpack.c.bf16 %v50, %v49
    %vm54 = vcmask 261120
    %v56 = vsel %vm54, %v51, 0
    %58 = vmatpush.bf16.msra.mxu0 0
    %59 = vmatpush.bf16.msra.mxu0 0
    %60 = vmatpush.bf16.msra.mxu0 0
    %61 = vmatpush.bf16.msra.mxu0 0
    %62 = vmatpush.bf16.msra.mxu0 0
    %63 = vmatpush.bf16.msra.mxu0 0
    %64 = vmatpush.bf16.msra.mxu0 %v53
    %65 = vmatpush.bf16.msra.mxu0 %v52
    %66 = vmatmul.bf16.gmra.mxu0 %v56
    %v67 = vpop.f32.mrf.mxu0
    %v68 = vadd.f32 0.0, %v67
    %v69 = vpop.f32.mrf.mxu0
    %v70 = vadd.f32 0.0, %v69
    %71 = vdwg.mxu0
    %72 = vst.msk [vmem:[#allocation7] sm:$0xff] %vm54, %v68
    %73 = vst.msk [vmem:[#allocation7 + $0x8] sm:$0xff] %vm54, %v70
    // Predicated region
    $region18: #{tpu_custom_call.1} parent=1 // pred_check
      _
    $region19: #{tpu_custom_call.1} parent=1 // pred_check_branch
      %75 = sbr.rel (0) target = $region21
    $region20: #{tpu_custom_call.1} parent=1 // pred_region
      %77 = vsyncadd [#allocation4], 0
      %s78 = sshll.u32 [#allocation7], 4
      %s79 = int_to_ptr.vmem [resolvable:$true] %s78
      %s80 = sshll.u32 %s2, 4
      %s81 = int_to_ptr.hbm [resolvable:$true] %s80
      %86 = dma.vmem_to_hbm [thread:$0]  %s79, 256, %s81, [#allocation4], 128, 128, 8
    $region21: #{tpu_custom_call.1} parent=1 // pred_fallthru
      _
    // Predicated region
    $region22: #{tpu_custom_call.1} parent=1 // pred_check
      _
    $region23: #{tpu_custom_call.1} parent=1 // pred_check_branch
      %88 = sbr.rel (0) target = $region25
    $region24: #{tpu_custom_call.1} parent=1 // pred_region
      %90 = dma.done [#allocation4], 256
    $region25: #{tpu_custom_call.1} parent=1 // pred_fallthru
      _
    %91 = vsyncpa [#allocation3], 1
    %92 = vsyncpa [#allocation6], 1
    %93 = vsyncpa [#allocation4], 1

</llo_original>
